<compile_context>
chip_gen: v7x
topology: tpu7x:2x2x1
jax: 0.10.0
libtpu: 0.0.40
codegen_flags: <defaults>
</compile_context>

<pallas_src>
import functools
import math

import jax
import jax.numpy as jnp
from jax.experimental import pallas as pl
from jax.experimental.pallas import tpu as pltpu


def _cdiv(a, b):
    return -(-a // b)


def _round_up(a, b):
    return _cdiv(a, b) * b


def _lcm(a, b):
    return a * b // math.gcd(a, b)


def _vmem_footprint_bytes(rt, hidden, obs_vshape, x_itemsize):
    """Rough VMEM estimate: double-buffered pipeline blocks + live f32 tiles."""
    x_tile = _round_up(obs_vshape, 8) * rt * x_itemsize          # (obs, rt) block
    bias1 = hidden * rt * 4                                      # fused fc1 bias
    out_tile = 8 * rt * 4                                        # (1, rt) padded
    consts = (hidden * _round_up(obs_vshape, 128) * x_itemsize   # W1[:, :obs]
              + hidden * _round_up(hidden, 128) * x_itemsize     # W2
              + 2 * hidden * 128 * 4)                            # b2, w3 columns
    interm = 2 * hidden * rt * 4                                 # h1, h2 live
    return 2 * (x_tile + bias1 + out_tile + consts) + interm


def _critic_mlp_kernel(x_ref, w1_ref, bias1_ref, w2_ref, b2_ref, w3_ref, b3_ref,
                       q_ref):
    # x_ref arrives lane-dense: (obs_vshape, rt), already in the matmul dtype.
    # fc1 + fused (b1 + one-hot agent column of W1) bias + relu.  f32 acc.
    h1 = jnp.dot(w1_ref[...], x_ref[...],
                 preferred_element_type=jnp.float32)             # (hid, rt)
    h1 = jnp.maximum(h1 + bias1_ref[...], 0.0)

    # fc2 + relu (activations cast to the weight dtype -> native bf16 matmul
    # on the bf16 path; a no-op cast on the f32 path).
    h2 = jnp.dot(w2_ref[...], h1.astype(w2_ref.dtype),
                 preferred_element_type=jnp.float32)             # (hid, rt)
    h2 = jnp.maximum(h2 + b2_ref[...], 0.0)

    # fc3 value head as VPU multiply + sublane (XLU) reduction -> (1, rt),
    # lane-dense unmasked store.  b3 comes from SMEM.
    q = jnp.sum(h2 * w3_ref[...], axis=0, keepdims=True)         # (1, rt)
    q_ref[...] = (q + b3_ref[0]).astype(q_ref.dtype)


@functools.partial(jax.jit, static_argnames=("row_tile", "x_dtype"))
def ac_critic_forward(obs, params, *, row_tile=2048, x_dtype=jnp.float32):
    """obs: (bs, max_t, n_agents, obs_vshape) float32. params in PyTorch layout."""
    bs, max_t, n_agents, obs_vshape = obs.shape
    w1, b1, w2, b2, w3, b3 = params
    hidden = w1.shape[0]

    n_rows = bs * max_t * n_agents
    x_itemsize = jnp.dtype(x_dtype).itemsize

    # Row tile: multiple of 128 (lane-dense, unmasked stores) and of n_agents
    # (so the tiled per-agent bias lines up with every tile).
    align = _lcm(128, n_agents)
    max_tiles = _round_up(n_rows, align) // align
    rt = max(align, (row_tile // align) * align)
    rt = min(rt, _round_up(n_rows, align))
    # Prefer >= 4 grid steps (2 per v7x TensorCore), else >= 2, when the
    # problem is big enough to split without dropping below one aligned tile.
    for target_steps in (4, 2):
        if _cdiv(n_rows, rt) < target_steps and max_tiles >= target_steps:
            rt = max(align, _round_up(_cdiv(n_rows, target_steps), align))
            break
    # Cap the estimated VMEM footprint (~24 MiB) so big tiles still fit the
    # smaller scoped VMEM on v7x.
    vmem_budget = 24 << 20
    while rt > align and _vmem_footprint_bytes(rt, hidden, obs_vshape,
                                               x_itemsize) > vmem_budget:
        rt = max(align, _round_up(rt // 2, align))
    n_tiles = _cdiv(n_rows, rt)
    n_rows_pad = n_tiles * rt

    # Fold the one-hot agent id into a per-agent fc1 bias:
    #   fc1(concat(obs, onehot_a)) = W1[:, :obs] @ obs + (W1[:, obs + a] + b1)
    w1_obs = w1[:, :obs_vshape].astype(x_dtype)          # (hidden, obs_vshape)
    agent_bias = w1[:, obs_vshape:] + b1[:, None]        # (hidden, n_agents) f32
    # Rows are ordered (b, t, agent) with agent innermost; every tile starts on
    # an agent boundary (rt % n_agents == 0), so one tiled bias block serves all.
    bias1 = jnp.tile(agent_bias, (1, rt // n_agents))    # (hidden, rt) f32
    w2_c = w2.astype(x_dtype)                            # (hidden, hidden)
    b2col = b2[:, None]                                  # (hidden, 1) f32
    w3col = w3.reshape(hidden, 1)                        # (hidden, 1) f32
    b3_s = b3.reshape(1).astype(jnp.float32)             # (1,) SMEM scalar

    # Pre-transposed, lane-dense obs stream: (obs_vshape, n_rows_pad).
    x = obs.reshape(n_rows, obs_vshape).astype(x_dtype).T
    if n_rows_pad != n_rows:
        x = jnp.pad(x, ((0, 0), (0, n_rows_pad - n_rows)))

    q_rows = pl.pallas_call(
        _critic_mlp_kernel,
        out_shape=jax.ShapeDtypeStruct((1, n_rows_pad), jnp.float32),
        grid_spec=pltpu.PrefetchScalarGridSpec(
            num_scalar_prefetch=0,
            grid=(n_tiles,),
            in_specs=[
                pl.BlockSpec((obs_vshape, rt), lambda i: (0, i)),       # obs (lane-dense)
                pl.BlockSpec((hidden, obs_vshape), lambda i: (0, 0)),   # W1[:, :obs]
                pl.BlockSpec((hidden, rt), lambda i: (0, 0)),           # fused fc1 bias
                pl.BlockSpec((hidden, hidden), lambda i: (0, 0)),       # W2
                pl.BlockSpec((hidden, 1), lambda i: (0, 0)),            # b2
                pl.BlockSpec((hidden, 1), lambda i: (0, 0)),            # w3 column
                pl.BlockSpec(memory_space=pltpu.MemorySpace.SMEM),      # b3 scalar
            ],
            out_specs=pl.BlockSpec((1, rt), lambda i: (0, i)),          # lane-dense
        ),
        compiler_params=pltpu.CompilerParams(
            dimension_semantics=("parallel",)),
    )(x, w1_obs, bias1, w2_c, b2col, w3col, b3_s)

    q = q_rows[0, :n_rows]
    return q.reshape(bs, max_t, n_agents, 1)


def init_params(key, obs_dim, hidden):
    """PyTorch-style Linear init in native PyTorch layout: W is (out, in), b is (out,)."""
    ks = jax.random.split(key, 6)

    def lin(kw, kb, fan_in, fan_out):
        bound = 1.0 / jnp.sqrt(jnp.float32(fan_in))
        w = jax.random.uniform(kw, (fan_out, fan_in), jnp.float32, -bound, bound)
        b = jax.random.uniform(kb, (fan_out,), jnp.float32, -bound, bound)
        return w, b

    w1, b1 = lin(ks[0], ks[1], obs_dim, hidden)
    w2, b2 = lin(ks[2], ks[3], hidden, hidden)
    w3, b3 = lin(ks[4], ks[5], hidden, 1)
    return (w1, b1, w2, b2, w3, b3)


def _reference_forward(obs, params):
    """Pure-JAX reference with exactly the PyTorch module's math."""
    bs, max_t, n_agents, obs_vshape = obs.shape
    eye = jnp.eye(n_agents, dtype=obs.dtype)
    agent_ids = jnp.broadcast_to(eye[None, None], (bs, max_t, n_agents, n_agents))
    x = jnp.concatenate([obs, agent_ids], axis=-1)
    w1, b1, w2, b2, w3, b3 = params
    h1 = jax.nn.relu(x @ w1.T + b1)
    h2 = jax.nn.relu(h1 @ w2.T + b2)
    return h2 @ w3.T + b3


if __name__ == "__main__":
    # Small config consistent with the module: scheme['obs']['vshape'] = 12
    # (int -> non-image path), n_agents=4, hidden_dim=32, batch=2, max_seq_length=8.
    bs, max_t, n_agents, obs_vshape, hidden = 2, 8, 4, 12, 32
    obs_dim = obs_vshape + n_agents

    key = jax.random.PRNGKey(0)
    k_obs, k_params = jax.random.split(key)
    obs = jax.random.normal(k_obs, (bs, max_t, n_agents, obs_vshape), jnp.float32)
    params = init_params(k_params, obs_dim, hidden)

    # f32 path (default): exact parity with the PyTorch math.
    q = jax.block_until_ready(ac_critic_forward(obs, params))
    q_ref = _reference_forward(obs, params)
    assert q.shape == (bs, max_t, n_agents, 1)
    assert jnp.allclose(q, q_ref, atol=1e-4, rtol=1e-4)

    # bf16 path: obs stream, W1/W2 and fc2 activations in bf16 (native bf16
    # MXU matmuls, f32 accumulation).  Compare loosely against the f32 ref.
    q_bf = jax.block_until_ready(
        ac_critic_forward(obs, params, x_dtype=jnp.bfloat16))
    assert q_bf.shape == (bs, max_t, n_agents, 1)
    assert jnp.allclose(q_bf, q_ref, atol=5e-2, rtol=5e-2)

    print("KERNEL_OK")
</pallas_src>

<mosaic_0001>
module attributes {stable_mosaic.version = 11 : i64} {
  func.func @_critic_mlp_kernel(%arg0: i32, %arg1: memref<12x128xf32, #tpu.memory_space<vmem>>, %arg2: memref<32x12xf32, #tpu.memory_space<vmem>>, %arg3: memref<32x128xf32, #tpu.memory_space<vmem>>, %arg4: memref<32x32xf32, #tpu.memory_space<vmem>>, %arg5: memref<32x1xf32, #tpu.memory_space<vmem>>, %arg6: memref<32x1xf32, #tpu.memory_space<vmem>>, %arg7: memref<1xf32, #tpu.memory_space<smem>>, %arg8: memref<1x128xf32, #tpu.memory_space<vmem>>) attributes {dimension_semantics = [#tpu.dimension_semantics<parallel>], iteration_bounds = array<i64: 1>, scalar_prefetch = 0 : i64, scratch_operands = 0 : i64, tpu.core_type = #tpu.core_type<tc>, window_params = [{transform_indices = @transform_0, window_bounds = array<i64: 12, 128>}, {pipeline_mode = #tpu.pipeline_mode<synchronous>, transform_indices = @transform_1, window_bounds = array<i64: 32, 12>}, {pipeline_mode = #tpu.pipeline_mode<synchronous>, transform_indices = @transform_2, window_bounds = array<i64: 32, 128>}, {pipeline_mode = #tpu.pipeline_mode<synchronous>, transform_indices = @transform_3, window_bounds = array<i64: 32, 32>}, {pipeline_mode = #tpu.pipeline_mode<synchronous>, transform_indices = @transform_4, window_bounds = array<i64: 32, 1>}, {pipeline_mode = #tpu.pipeline_mode<synchronous>, transform_indices = @transform_5, window_bounds = array<i64: 32, 1>}, {transform_indices = @transform_6, window_bounds = array<i64: 1>}, {transform_indices = @transform_7, window_bounds = array<i64: 1, 128>}]} {
    %c0 = arith.constant 0 : index
    %c0_0 = arith.constant 0 : index
    %0 = vector.load %arg2[%c0, %c0_0] : memref<32x12xf32, #tpu.memory_space<vmem>>, vector<32x12xf32>
    %c0_1 = arith.constant 0 : index
    %c0_2 = arith.constant 0 : index
    %1 = vector.load %arg1[%c0_1, %c0_2] : memref<12x128xf32, #tpu.memory_space<vmem>>, vector<12x128xf32>
    %cst = arith.constant dense<0.000000e+00> : vector<32x128xf32>
    %2 = tpu.matmul %0, %1, %cst {dimension_numbers = #tpu.dot_dimension_numbers<[1], [0], [0], [1], [0, 0, 1, 1], [], []>} : vector<32x12xf32>, vector<12x128xf32>, vector<32x128xf32> -> vector<32x128xf32>
    %c0_3 = arith.constant 0 : index
    %c0_4 = arith.constant 0 : index
    %3 = vector.load %arg3[%c0_3, %c0_4] : memref<32x128xf32, #tpu.memory_space<vmem>>, vector<32x128xf32>
    %4 = arith.addf %2, %3 : vector<32x128xf32>
    %cst_5 = arith.constant 0.000000e+00 : f32
    %5 = vector.broadcast %cst_5 : f32 to vector<32x128xf32>
    %6 = arith.maximumf %4, %5 : vector<32x128xf32>
    %c0_6 = arith.constant 0 : index
    %c0_7 = arith.constant 0 : index
    %7 = vector.load %arg4[%c0_6, %c0_7] : memref<32x32xf32, #tpu.memory_space<vmem>>, vector<32x32xf32>
    %cst_8 = arith.constant dense<0.000000e+00> : vector<32x128xf32>
    %8 = tpu.matmul %7, %6, %cst_8 {dimension_numbers = #tpu.dot_dimension_numbers<[1], [0], [0], [1], [0, 0, 1, 1], [], []>} : vector<32x32xf32>, vector<32x128xf32>, vector<32x128xf32> -> vector<32x128xf32>
    %c0_9 = arith.constant 0 : index
    %c0_10 = arith.constant 0 : index
    %9 = vector.load %arg5[%c0_9, %c0_10] : memref<32x1xf32, #tpu.memory_space<vmem>>, vector<32x1xf32>
    %10 = vector.broadcast %9 : vector<32x1xf32> to vector<32x128xf32>
    %11 = arith.addf %8, %10 : vector<32x128xf32>
    %cst_11 = arith.constant 0.000000e+00 : f32
    %12 = vector.broadcast %cst_11 : f32 to vector<32x128xf32>
    %13 = arith.maximumf %11, %12 : vector<32x128xf32>
    %c0_12 = arith.constant 0 : index
    %c0_13 = arith.constant 0 : index
    %14 = vector.load %arg6[%c0_12, %c0_13] : memref<32x1xf32, #tpu.memory_space<vmem>>, vector<32x1xf32>
    %15 = vector.broadcast %14 : vector<32x1xf32> to vector<32x128xf32>
    %16 = arith.mulf %13, %15 : vector<32x128xf32>
    %cst_14 = arith.constant dense<0.000000e+00> : vector<128xf32>
    %17 = vector.multi_reduction <add>, %16, %cst_14 [0] : vector<32x128xf32> to vector<128xf32>
    %18 = vector.shape_cast %17 : vector<128xf32> to vector<1x128xf32>
    %c0_15 = arith.constant 0 : index
    %19 = memref.load %arg7[%c0_15] : memref<1xf32, #tpu.memory_space<smem>>
    %20 = vector.broadcast %19 : f32 to vector<1x128xf32>
    %21 = arith.addf %18, %20 : vector<1x128xf32>
    %c0_16 = arith.constant 0 : index
    %c0_17 = arith.constant 0 : index
    %22 = vector.load %arg8[%c0_16, %c0_17] : memref<1x128xf32, #tpu.memory_space<vmem>>, vector<1x128xf32>
    tpu.vector_store %arg8[%c0_16, %c0_17], %21 {strides = array<i32>} : memref<1x128xf32, #tpu.memory_space<vmem>>, vector<1x128xf32>,
    return
  }
  func.func @transform_0(%arg0: i32) -> (i32, i32) {
    %c0_i32 = arith.constant 0 : i32
    %c0_i32_0 = arith.constant 0 : i32
    return %c0_i32, %arg0 : i32, i32
  }
  func.func @transform_1(%arg0: i32) -> (i32, i32) {
    %c0_i32 = arith.constant 0 : i32
    %c0_i32_0 = arith.constant 0 : i32
    %c0_i32_1 = arith.constant 0 : i32
    return %c0_i32, %c0_i32_0 : i32, i32
  }
  func.func @transform_2(%arg0: i32) -> (i32, i32) {
    %c0_i32 = arith.constant 0 : i32
    %c0_i32_0 = arith.constant 0 : i32
    %c0_i32_1 = arith.constant 0 : i32
    return %c0_i32, %c0_i32_0 : i32, i32
  }
  func.func @transform_3(%arg0: i32) -> (i32, i32) {
    %c0_i32 = arith.constant 0 : i32
    %c0_i32_0 = arith.constant 0 : i32
    %c0_i32_1 = arith.constant 0 : i32
    return %c0_i32, %c0_i32_0 : i32, i32
  }
  func.func @transform_4(%arg0: i32) -> (i32, i32) {
    %c0_i32 = arith.constant 0 : i32
    %c0_i32_0 = arith.constant 0 : i32
    %c0_i32_1 = arith.constant 0 : i32
    return %c0_i32, %c0_i32_0 : i32, i32
  }
  func.func @transform_5(%arg0: i32) -> (i32, i32) {
    %c0_i32 = arith.constant 0 : i32
    %c0_i32_0 = arith.constant 0 : i32
    %c0_i32_1 = arith.constant 0 : i32
    return %c0_i32, %c0_i32_0 : i32, i32
  }
  func.func @transform_6(%arg0: i32) -> i32 {
    %c0_i32 = arith.constant 0 : i32
    %c0_i32_0 = arith.constant 0 : i32
    return %c0_i32 : i32
  }
  func.func @transform_7(%arg0: i32) -> (i32, i32) {
    %c0_i32 = arith.constant 0 : i32
    %c0_i32_0 = arith.constant 0 : i32
    return %c0_i32, %arg0 : i32, i32
  }
}

</mosaic_0001>

<llo_original>
// kernel: squeeze.1
$region0: #{squeeze.1}
  %s0 = inlined_call_operand.vmem [shape: f32[64], index: 0, kind: input, shape index: {}]
  %s1 = inlined_call_operand.vmem [shape: f32[2,8,4,1], index: 1, kind: output, shape index: {}]
  $region1: #{squeeze.1} parent=0
    #allocation0 [shape = 'u8[4096]{0}', space=vmem, size = 0x1000, scoped, tag = 'scoped mem for input reshape']
    %s3 = sshllo.u32 0, 1
    %v4 = vld [vmem:[%s0] sm:%s3]
    %5 = vst [vmem:[#allocation0] sm:%s3] %v4
    %v6 = vld [vmem:[#allocation0] sm:$0x1]
    %vm7 = vcmask 31744
    %8 = vst.msk [vmem:[%s1] sm:$0x1] %vm7, %v6
    %v9 = vld [vmem:[#allocation0] sm:$0x1]
    %10 = vrot.lane.b32.xlu0 %v9, 124
    %v11 = vpop.permute.xlu0 %10
    %vm12 = vcmask 31744
    %s13 = scalar_lea.vmem %s1, 1
    %14 = vst.msk [vmem:[%s13] sm:$0x1] %vm12, %v11
    %v15 = vld [vmem:[#allocation0] sm:$0x1]
    %16 = vrot.lane.b32.xlu0 %v15, 120
    %v17 = vpop.permute.xlu0 %16
    %vm18 = vcmask 31744
    %s19 = scalar_lea.vmem %s1, 2
    %20 = vst.msk [vmem:[%s19] sm:$0x1] %vm18, %v17
    %v21 = vld [vmem:[#allocation0] sm:$0x1]
    %22 = vrot.lane.b32.xlu0 %v21, 116
    %v23 = vpop.permute.xlu0 %22
    %vm24 = vcmask 31744
    %s25 = scalar_lea.vmem %s1, 3
    %26 = vst.msk [vmem:[%s25] sm:$0x1] %vm24, %v23
    %v27 = vld [vmem:[#allocation0] sm:$0x1]
    %28 = vrot.lane.b32.xlu0 %v27, 112
    %v29 = vpop.permute.xlu0 %28
    %vm30 = vcmask 31744
    %s31 = scalar_lea.vmem %s1, 4
    %32 = vst.msk [vmem:[%s31] sm:$0x1] %vm30, %v29
    %v33 = vld [vmem:[#allocation0] sm:$0x1]
    %34 = vrot.lane.b32.xlu0 %v33, 108
    %v35 = vpop.permute.xlu0 %34
    %vm36 = vcmask 31744
    %s37 = scalar_lea.vmem %s1, 5
    %38 = vst.msk [vmem:[%s37] sm:$0x1] %vm36, %v35
    %v39 = vld [vmem:[#allocation0] sm:$0x1]
    %40 = vrot.lane.b32.xlu0 %v39, 104
    %v41 = vpop.permute.xlu0 %40
    %vm42 = vcmask 31744
    %s43 = scalar_lea.vmem %s1, 6
    %44 = vst.msk [vmem:[%s43] sm:$0x1] %vm42, %v41
    %v45 = vld [vmem:[#allocation0] sm:$0x1]
    %46 = vrot.lane.b32.xlu0 %v45, 100
    %v47 = vpop.permute.xlu0 %46
    %vm48 = vcmask 31744
    %s49 = scalar_lea.vmem %s1, 7
    %50 = vst.msk [vmem:[%s49] sm:$0x1] %vm48, %v47
    %v51 = vld [vmem:[#allocation0] sm:$0x1]
    %52 = vrot.lane.b32.xlu0 %v51, 96
    %v53 = vpop.permute.xlu0 %52
    %vm54 = vcmask 31744
    %s55 = scalar_lea.vmem %s1, 8
    %56 = vst.msk [vmem:[%s55] sm:$0x1] %vm54, %v53
    %v57 = vld [vmem:[#allocation0] sm:$0x1]
    %58 = vrot.lane.b32.xlu0 %v57, 92
    %v59 = vpop.permute.xlu0 %58
    %vm60 = vcmask 31744
    %s61 = scalar_lea.vmem %s1, 9
    %62 = vst.msk [vmem:[%s61] sm:$0x1] %vm60, %v59
    %v63 = vld [vmem:[#allocation0] sm:$0x1]
    %64 = vrot.lane.b32.xlu0 %v63, 88
    %v65 = vpop.permute.xlu0 %64
    %vm66 = vcmask 31744
    %s67 = scalar_lea.vmem %s1, 10
    %68 = vst.msk [vmem:[%s67] sm:$0x1] %vm66, %v65
    %v69 = vld [vmem:[#allocation0] sm:$0x1]
    %70 = vrot.lane.b32.xlu0 %v69, 84
    %v71 = vpop.permute.xlu0 %70
    %vm72 = vcmask 31744
    %s73 = scalar_lea.vmem %s1, 11
    %74 = vst.msk [vmem:[%s73] sm:$0x1] %vm72, %v71
    %v75 = vld [vmem:[#allocation0] sm:$0x1]
    %76 = vrot.lane.b32.xlu0 %v75, 80
    %v77 = vpop.permute.xlu0 %76
    %vm78 = vcmask 31744
    %s79 = scalar_lea.vmem %s1, 12
    %80 = vst.msk [vmem:[%s79] sm:$0x1] %vm78, %v77
    %v81 = vld [vmem:[#allocation0] sm:$0x1]
    %82 = vrot.lane.b32.xlu0 %v81, 76
    %v83 = vpop.permute.xlu0 %82
    %vm84 = vcmask 31744
    %s85 = scalar_lea.vmem %s1, 13
    %86 = vst.msk [vmem:[%s85] sm:$0x1] %vm84, %v83
    %v87 = vld [vmem:[#allocation0] sm:$0x1]
    %88 = vrot.lane.b32.xlu0 %v87, 72
    %v89 = vpop.permute.xlu0 %88
    %vm90 = vcmask 31744
    %s91 = scalar_lea.vmem %s1, 14
    %92 = vst.msk [vmem:[%s91] sm:$0x1] %vm90, %v89
    %v93 = vld [vmem:[#allocation0] sm:$0x1]
    %94 = vrot.lane.b32.xlu0 %v93, 68
    %v95 = vpop.permute.xlu0 %94
    %vm96 = vcmask 31744
    %s97 = scalar_lea.vmem %s1, 15
    %98 = vst.msk [vmem:[%s97] sm:$0x1] %vm96, %v95

// kernel: ac_critic_forward.1
$region0: #{ac_critic_forward.1}
  #allocation0 [shape = 'u32[]', space=smem, size = 0x4, offset = 0x4, fixed_abs, tag = 'smem constant byte address 0x4 - core index']
  #allocation1 [shape = 'u32[144,128]{1,0:T(1,128)}', space=vmem, size = 0x12000, scoped, tag = 'internal scratch']
  #allocation2 [shape = 'f32[1]{0:T(128)S(6)}', space=smem, size = 0x200, scoped, tag = 'scoped memory for ac_critic_forward.1']
  %s0 = inlined_call_operand.vmem [shape: f32[12,128], index: 0, kind: input, shape index: {}]
  %s1 = inlined_call_operand.vmem [shape: f32[32,12], index: 1, kind: input, shape index: {}]
  %s2 = inlined_call_operand.vmem [shape: f32[32,128], index: 2, kind: input, shape index: {}]
  %s3 = inlined_call_operand.vmem [shape: f32[32,32], index: 3, kind: input, shape index: {}]
  %s4 = inlined_call_operand.vmem [shape: f32[32,1], index: 4, kind: input, shape index: {}]
  %s5 = inlined_call_operand.vmem [shape: f32[32,1], index: 5, kind: input, shape index: {}]
  %s6 = inlined_call_operand.<no memory space> [shape: f32[1], index: 6, kind: input, shape index: {}]
  %s7 = inlined_call_operand.vmem [shape: f32[1,128], index: 7, kind: output, shape index: {}]
  %s8 = sld [smem:[#allocation0]]
  $region38: #{ac_critic_forward.1} parent=0
    _
  %s10 = ssub.s32 1, %s8
  %s11 = scalar_select 0, %s10, %s8
  %12 = sst [smem:[#allocation2]] %s6
  // Predicated region
  $region2: #{ac_critic_forward.1} parent=0 // pred_check
    _
  $region3: #{ac_critic_forward.1} parent=0 // pred_check_branch
    %14 = sbr.rel (0) target = $region5
  $region4: #{ac_critic_forward.1} parent=0 // pred_region
    _
  $region5: #{ac_critic_forward.1} parent=0 // pred_fallthru
    _
  // Predicated region
  $region6: #{ac_critic_forward.1} parent=0 // pred_check
    _
  $region7: #{ac_critic_forward.1} parent=0 // pred_check_branch
    %16 = sbr.rel (0) target = $region9
  $region8: #{ac_critic_forward.1} parent=0 // pred_region
    _
  $region9: #{ac_critic_forward.1} parent=0 // pred_fallthru
    _
  // Predicated region
  $region10: #{ac_critic_forward.1} parent=0 // pred_check
    _
  $region11: #{ac_critic_forward.1} parent=0 // pred_check_branch
    %18 = sbr.rel (0) target = $region13
  $region12: #{ac_critic_forward.1} parent=0 // pred_region
    _
  $region13: #{ac_critic_forward.1} parent=0 // pred_fallthru
    _
  // Predicated region
  $region14: #{ac_critic_forward.1} parent=0 // pred_check
    _
  $region15: #{ac_critic_forward.1} parent=0 // pred_check_branch
    %20 = sbr.rel (0) target = $region17
  $region16: #{ac_critic_forward.1} parent=0 // pred_region
    _
  $region17: #{ac_critic_forward.1} parent=0 // pred_fallthru
    _
  // Predicated region
  $region18: #{ac_critic_forward.1} parent=0 // pred_check
    _
  $region19: #{ac_critic_forward.1} parent=0 // pred_check_branch
    %22 = sbr.rel (0) target = $region21
  $region20: #{ac_critic_forward.1} parent=0 // pred_region
    _
  $region21: #{ac_critic_forward.1} parent=0 // pred_fallthru
    _
  // Predicated region
  $region22: #{ac_critic_forward.1} parent=0 // pred_check
    _
  $region23: #{ac_critic_forward.1} parent=0 // pred_check_branch
    %24 = sbr.rel (0) target = $region25
  $region24: #{ac_critic_forward.1} parent=0 // pred_region
    _
  $region25: #{ac_critic_forward.1} parent=0 // pred_fallthru
    _
  // Predicated region
  $region26: #{ac_critic_forward.1} parent=0 // pred_check
    _
  $region27: #{ac_critic_forward.1} parent=0 // pred_check_branch
    %26 = sbr.rel (0) target = $region29
  $region28: #{ac_critic_forward.1} parent=0 // pred_region
    _
  $region29: #{ac_critic_forward.1} parent=0 // pred_fallthru
    _
  %v27 = vld [vmem:[%s1] sm:$0xff]
  %v28 = vld [vmem:[%s1 + $0x8] sm:$0xff]
  %v29 = vld [vmem:[%s1 + $0x10] sm:$0xff]
  %v30 = vld [vmem:[%s1 + $0x18] sm:$0xff]
  %v31 = vld [vmem:[%s0] sm:$0xff]
  %v32 = vld [vmem:[%s0 + $0x8] sm:$0xf]
  %v33 = vld [vmem:[%s2] sm:$0xff]
  %v34 = vld [vmem:[%s2 + $0x8] sm:$0xff]
  %v35 = vld [vmem:[%s2 + $0x10] sm:$0xff]
  %v36 = vld [vmem:[%s2 + $0x18] sm:$0xff]
  %vm37 = vcmask 97280
  %v39 = vsel %vm37, %v27, 0
  %v42 = vsel %vm37, %v28, 0
  %v45 = vsel %vm37, %v29, 0
  %v48 = vsel %vm37, %v30, 0
  %vm50 = vcmask 1043456
  %v52 = vsel %vm50, %v32, 0
  %54 = vmatprep.subr.mxu0 0.0
  %55 = vmatpush1.msra.mxu0 %v31
  %56 = vmatprep.subr.mxu0 0.0
  %57 = vmatpush1.msra.mxu0 %v52
  %58 = vmatprep.subr.mxu0 0.0
  %59 = vmatpush1.msra.mxu0 0.0
  %60 = vmatprep.subr.mxu0 0.0
  %61 = vmatpush1.msra.mxu0 0.0
  %62 = vmatprep.subr.mxu0 0.0
  %63 = vmatpush1.msra.mxu0 0.0
  %64 = vmatprep.subr.mxu0 0.0
  %65 = vmatpush1.msra.mxu0 0.0
  %66 = vmatprep.subr.mxu0 0.0
  %67 = vmatpush1.msra.mxu0 0.0
  %68 = vmatprep.subr.mxu0 0.0
  %69 = vmatpush1.msra.mxu0 0.0
  %70 = vmatprep.subr.mxu0 0.0
  %71 = vmatpush1.msra.mxu0 0.0
  %72 = vmatprep.subr.mxu0 0.0
  %73 = vmatpush1.msra.mxu0 0.0
  %74 = vmatprep.subr.mxu0 0.0
  %75 = vmatpush1.msra.mxu0 0.0
  %76 = vmatprep.subr.mxu0 0.0
  %77 = vmatpush1.msra.mxu0 0.0
  %78 = vmatprep.subr.mxu0 0.0
  %79 = vmatpush1.msra.mxu0 0.0
  %80 = vmatprep.subr.mxu0 0.0
  %81 = vmatpush1.msra.mxu0 0.0
  %82 = vmatprep.subr.mxu0 0.0
  %83 = vmatpush1.msra.mxu0 0.0
  %84 = vmatprep.subr.mxu0 0.0
  %85 = vmatpush1.msra.mxu0 0.0
  %86 = vmatprep.subr.mxu0 0.0
  %87 = vmatpush1.msra.mxu0 0.0
  %88 = vmatprep.subr.mxu0 0.0
  %89 = vmatpush1.msra.mxu0 0.0
  %90 = vmatprep.subr.mxu0 0.0
  %91 = vmatpush1.msra.mxu0 0.0
  %92 = vmatprep.subr.mxu0 0.0
  %93 = vmatpush1.msra.mxu0 0.0
  %94 = vmatprep.subr.mxu0 0.0
  %95 = vmatpush1.msra.mxu0 0.0
  %96 = vmatprep.subr.mxu0 0.0
  %97 = vmatpush1.msra.mxu0 0.0
  %98 = vmatprep.subr.mxu0 0.0
  %99 = vmatpush1.msra.mxu0 0.0
  %100 = vmatprep.subr.mxu0 0.0
  %101 = vmatpush1.msra.mxu0 0.0
  %102 = vmatprep.subr.mxu0 0.0
  %103 = vmatpush1.msra.mxu0 0.0
  %104 = vmatprep.subr.mxu0 0.0
  %105 = vmatpush1.msra.mxu0 0.0
  %106 = vmatprep.subr.mxu0 0.0
  %107 = vmatpush1.msra.mxu0 0.0
  %108 = vmatprep.subr.mxu0 0.0
  %109 = vmatpush1.msra.mxu0 0.0
  %110 = vmatprep.subr.mxu0 0.0
  %111 = vmatpush1.msra.mxu0 0.0
  %112 = vmatprep.subr.mxu0 0.0
  %113 = vmatpush1.msra.mxu0 0.0
  %114 = vmatprep.subr.mxu0 0.0
  %115 = vmatpush1.msra.mxu0 0.0
  %116 = vmatprep.subr.mxu0 0.0
  %117 = vmatpush1.msra.mxu0 0.0
  %118 = vmatprep.mubr.f32.mxu0 0.0
  %119 = vmatmul.mubr.f32.gmra.mrb[0].mxu0 %v39
  %v120 = vpop.f32.mrb[0].mxu0
  %v121 = vadd.f32 %v33, %v120
  %v122 = vpop.f32.mrb[0].mxu0
  %123 = vmatprep.mubr.f32.mxu0 0.0
  %124 = vmatmul.mubr.f32.gmra.mrb[0].mxu0 %v42
  %v125 = vpop.f32.mrb[0].mxu0
  %v126 = vadd.f32 %v34, %v125
  %v127 = vpop.f32.mrb[0].mxu0
  %128 = vmatprep.mubr.f32.mxu0 0.0
  %129 = vmatmul.mubr.f32.gmra.mrb[0].mxu0 %v45
  %v130 = vpop.f32.mrb[0].mxu0
  %v131 = vadd.f32 %v35, %v130
  %v132 = vpop.f32.mrb[0].mxu0
  %133 = vmatprep.mubr.f32.mxu0 0.0
  %134 = vmatmul.mubr.f32.gmra.mrb[0].mxu0 %v48
  %v135 = vpop.f32.mrb[0].mxu0
  %v136 = vadd.f32 %v36, %v135
  %v137 = vpop.f32.mrb[0].mxu0
  %138 = vdwg.mxu0
  %v139 = vmax.f32 %v121, 0.0
  %v140 = vmax.f32 %v126, 0.0
  %v141 = vmax.f32 %v131, 0.0
  %v142 = vmax.f32 %v136, 0.0
  %v143 = vld [vmem:[%s3] sm:$0xff]
  %v144 = vld [vmem:[%s3 + $0x8] sm:$0xff]
  %v145 = vld [vmem:[%s3 + $0x10] sm:$0xff]
  %v146 = vld [vmem:[%s3 + $0x18] sm:$0xff]
  %v147 = vld [vmem:[%s4] sm:$0xff]
  %v148 = vld [vmem:[%s4 + $0x8] sm:$0xff]
  %v149 = vld [vmem:[%s4 + $0x10] sm:$0xff]
  %v150 = vld [vmem:[%s4 + $0x18] sm:$0xff]
  %152 = vset.pattern.permute.xlu0 0
  %153 = vperm.xlu0 %152, %v147
  %v154 = vpop.permute.xlu0 %153
  %157 = vset.pattern.permute.xlu0 0
  %158 = vperm.xlu0 %157, %v148
  %v159 = vpop.permute.xlu0 %158
  %162 = vset.pattern.permute.xlu0 0
  %163 = vperm.xlu0 %162, %v149
  %v164 = vpop.permute.xlu0 %163
  %167 = vset.pattern.permute.xlu0 0
  %168 = vperm.xlu0 %167, %v150
  %v169 = vpop.permute.xlu0 %168
  %vm171 = vcmask 261120
  %v173 = vsel %vm171, %v143, 0
  %v176 = vsel %vm171, %v144, 0
  %v179 = vsel %vm171, %v145, 0
  %v182 = vsel %vm171, %v146, 0
  %184 = vmatprep.subr.mxu0 0.0
  %185 = vmatpush1.msra.mxu0 %v139
  %186 = vmatprep.subr.mxu0 0.0
  %187 = vmatpush1.msra.mxu0 %v140
  %188 = vmatprep.subr.mxu0 0.0
  %189 = vmatpush1.msra.mxu0 %v141
  %190 = vmatprep.subr.mxu0 0.0
  %191 = vmatpush1.msra.mxu0 %v142
  %192 = vmatprep.subr.mxu0 0.0
  %193 = vmatpush1.msra.mxu0 0.0
  %194 = vmatprep.subr.mxu0 0.0
  %195 = vmatpush1.msra.mxu0 0.0
  %196 = vmatprep.subr.mxu0 0.0
  %197 = vmatpush1.msra.mxu0 0.0
  %198 = vmatprep.subr.mxu0 0.0
  %199 = vmatpush1.msra.mxu0 0.0
  %200 = vmatprep.subr.mxu0 0.0
  %201 = vmatpush1.msra.mxu0 0.0
  %202 = vmatprep.subr.mxu0 0.0
  %203 = vmatpush1.msra.mxu0 0.0
  %204 = vmatprep.subr.mxu0 0.0
  %205 = vmatpush1.msra.mxu0 0.0
  %206 = vmatprep.subr.mxu0 0.0
  %207 = vmatpush1.msra.mxu0 0.0
  %208 = vmatprep.subr.mxu0 0.0
  %209 = vmatpush1.msra.mxu0 0.0
  %210 = vmatprep.subr.mxu0 0.0
  %211 = vmatpush1.msra.mxu0 0.0
  %212 = vmatprep.subr.mxu0 0.0
  %213 = vmatpush1.msra.mxu0 0.0
  %214 = vmatprep.subr.mxu0 0.0
  %215 = vmatpush1.msra.mxu0 0.0
  %216 = vmatprep.subr.mxu0 0.0
  %217 = vmatpush1.msra.mxu0 0.0
  %218 = vmatprep.subr.mxu0 0.0
  %219 = vmatpush1.msra.mxu0 0.0
  %220 = vmatprep.subr.mxu0 0.0
  %221 = vmatpush1.msra.mxu0 0.0
  %222 = vmatprep.subr.mxu0 0.0
  %223 = vmatpush1.msra.mxu0 0.0
  %224 = vmatprep.subr.mxu0 0.0
  %225 = vmatpush1.msra.mxu0 0.0
  %226 = vmatprep.subr.mxu0 0.0
  %227 = vmatpush1.msra.mxu0 0.0
  %228 = vmatprep.subr.mxu0 0.0
  %229 = vmatpush1.msra.mxu0 0.0
  %230 = vmatprep.subr.mxu0 0.0
  %231 = vmatpush1.msra.mxu0 0.0
  %232 = vmatprep.subr.mxu0 0.0
  %233 = vmatpush1.msra.mxu0 0.0
  %234 = vmatprep.subr.mxu0 0.0
  %235 = vmatpush1.msra.mxu0 0.0
  %236 = vmatprep.subr.mxu0 0.0
  %237 = vmatpush1.msra.mxu0 0.0
  %238 = vmatprep.subr.mxu0 0.0
  %239 = vmatpush1.msra.mxu0 0.0
  %240 = vmatprep.subr.mxu0 0.0
  %241 = vmatpush1.msra.mxu0 0.0
  %242 = vmatprep.subr.mxu0 0.0
  %243 = vmatpush1.msra.mxu0 0.0
  %244 = vmatprep.subr.mxu0 0.0
  %245 = vmatpush1.msra.mxu0 0.0
  %246 = vmatprep.subr.mxu0 0.0
  %247 = vmatpush1.msra.mxu0 0.0
  %248 = vmatprep.mubr.f32.mxu0 0.0
  %249 = vmatmul.mubr.f32.gmra.mrb[0].mxu0 %v173
  %v250 = vpop.f32.mrb[0].mxu0
  %v251 = vadd.f32 %v154, %v250
  %v252 = vpop.f32.mrb[0].mxu0
  %253 = vmatprep.mubr.f32.mxu0 0.0
  %254 = vmatmul.mubr.f32.gmra.mrb[0].mxu0 %v176
  %v255 = vpop.f32.mrb[0].mxu0
  %v256 = vadd.f32 %v159, %v255
  %v257 = vpop.f32.mrb[0].mxu0
  %258 = vmatprep.mubr.f32.mxu0 0.0
  %259 = vmatmul.mubr.f32.gmra.mrb[0].mxu0 %v179
  %v260 = vpop.f32.mrb[0].mxu0
  %v261 = vadd.f32 %v164, %v260
  %v262 = vpop.f32.mrb[0].mxu0
  %263 = vmatprep.mubr.f32.mxu0 0.0
  %264 = vmatmul.mubr.f32.gmra.mrb[0].mxu0 %v182
  %v265 = vpop.f32.mrb[0].mxu0
  %v266 = vadd.f32 %v169, %v265
  %v267 = vpop.f32.mrb[0].mxu0
  %268 = vdwg.mxu0
  %v269 = vmax.f32 %v251, 0.0
  %v270 = vmax.f32 %v256, 0.0
  %v271 = vmax.f32 %v261, 0.0
  %v272 = vmax.f32 %v266, 0.0
  %v273 = vld [vmem:[%s5] sm:$0xff]
  %v274 = vld [vmem:[%s5 + $0x8] sm:$0xff]
  %v275 = vld [vmem:[%s5 + $0x10] sm:$0xff]
  %v276 = vld [vmem:[%s5 + $0x18] sm:$0xff]
  %278 = vset.pattern.permute.xlu0 0
  %279 = vperm.xlu0 %278, %v273
  %v280 = vpop.permute.xlu0 %279
  %283 = vset.pattern.permute.xlu0 0
  %284 = vperm.xlu0 %283, %v274
  %v285 = vpop.permute.xlu0 %284
  %288 = vset.pattern.permute.xlu0 0
  %289 = vperm.xlu0 %288, %v275
  %v290 = vpop.permute.xlu0 %289
  %293 = vset.pattern.permute.xlu0 0
  %294 = vperm.xlu0 %293, %v276
  %v295 = vpop.permute.xlu0 %294
  %v297 = vmul.f32 %v269, %v280
  %v298 = vmul.f32 %v270, %v285
  %v299 = vmul.f32 %v271, %v290
  %v300 = vmul.f32 %v272, %v295
  %v301 = vadd.f32 %v297, %v298
  %v302 = vadd.f32 %v301, %v299
  %v303 = vadd.f32 %v302, %v300
  %v304 = vrot.slane %v303, 4
  %v305 = vadd.f32 %v303, %v304
  %v306 = vrot.slane %v305, 2
  %v307 = vadd.f32 %v305, %v306
  %v308 = vrot.slane %v307, 1
  %v309 = vadd.f32 %v307, %v308
  %s310 = sld [smem:[#allocation2]]
  %v311 = vstv %s310
  %v312 = vadd.f32 %v309, %v311
  %313 = vst [vmem:[%s7] sm:$0x1] %v312
  // Predicated region
  $region30: #{ac_critic_forward.1} parent=0 // pred_check
    _
  $region31: #{ac_critic_forward.1} parent=0 // pred_check_branch
    %315 = sbr.rel (0) target = $region33
  $region32: #{ac_critic_forward.1} parent=0 // pred_region
    _
  $region33: #{ac_critic_forward.1} parent=0 // pred_fallthru
    _
  // Predicated region
  $region34: #{ac_critic_forward.1} parent=0 // pred_check
    _
  $region35: #{ac_critic_forward.1} parent=0 // pred_check_branch
    %317 = sbr.rel (0) target = $region37
  $region36: #{ac_critic_forward.1} parent=0 // pred_region
    _
  $region37: #{ac_critic_forward.1} parent=0 // pred_fallthru
    _

</llo_original>
